<compile_context>
chip_gen: v7x
topology: tpu7x:2x2x1
jax: 0.10.0
libtpu: 0.0.40
codegen_flags: <defaults>
</compile_context>

<pallas_src>
import jax
import jax.numpy as jnp
from jax import lax
from jax.experimental import pallas as pl
from jax.experimental.pallas import tpu as pltpu
import numpy as np


# ----------------------------------------------------------------------------
# helpers
# ----------------------------------------------------------------------------
def _pick_row_tile(n, max_tile=512):
    """Largest TQ with n % TQ == 0 and (TQ == n or TQ % 128 == 0)."""
    if n <= max_tile:
        return n
    t = (max_tile // 128) * 128
    while t >= 128:
        if n % t == 0:
            return t
        t -= 128
    return n


# ----------------------------------------------------------------------------
# Pass A: diag(softmax(q @ k^T, axis=-1)) — the N x N matrix never hits HBM.
# ----------------------------------------------------------------------------
def _softmax_diag_kernel(q_ref, k_ref, kd_ref, o_ref):
    # q_ref: (1, TQ, D)  k_ref: (1, N, D)  kd_ref: (1, TQ, D)  o_ref: (1, TQ, 1)
    # Row-tile logits against all N keys (contract D directly; no transpose).
    s = lax.dot_general(q_ref[0], k_ref[0], (((1,), (1,)), ((), ())),
                        preferred_element_type=jnp.float32)          # (TQ, N)
    m = jnp.max(s, axis=-1, keepdims=True)                           # (TQ, 1)
    denom = jnp.sum(jnp.exp(s - m), axis=-1, keepdims=True)          # (TQ, 1)
    # Diagonal logit directly: s_ii = <q_row, k_row> on the matching k rows.
    diag_s = jnp.sum(q_ref[0].astype(jnp.float32)
                     * kd_ref[0].astype(jnp.float32),
                     axis=-1, keepdims=True)                         # (TQ, 1)
    # Exact divide (only TQ values) so cross-row top-k matches the reference.
    o_ref[0] = jnp.exp(diag_s - m) / denom


def softmax_diag(q, k, max_row_tile=512):
    B, N, D = q.shape
    tq = _pick_row_tile(N, max_row_tile)
    out = pl.pallas_call(
        _softmax_diag_kernel,
        out_shape=jax.ShapeDtypeStruct((B, N, 1), jnp.float32),
        grid=(B, N // tq),
        in_specs=[
            pl.BlockSpec((1, tq, D), lambda b, i: (b, i, 0)),   # q row tile
            pl.BlockSpec((1, N, D), lambda b, i: (b, 0, 0)),    # full k (resident)
            pl.BlockSpec((1, tq, D), lambda b, i: (b, i, 0)),   # k rows matching q tile
        ],
        out_specs=pl.BlockSpec((1, tq, 1), lambda b, i: (b, i, 0)),
        compiler_params=pltpu.CompilerParams(
            dimension_semantics=("parallel", "parallel")),
    )(q, k, k)
    return out[:, :, 0]                                              # (B, N)


# ----------------------------------------------------------------------------
# Pass B: K x K relationship logits restricted to the selected instances.
# top_k_indices are scalar-prefetched into SMEM; rows gathered in-kernel.
# ----------------------------------------------------------------------------
def _rel_scores_kernel(idx_ref, q_ref, k_ref, o_ref, qs_ref, ks_ref):
    # idx_ref: SMEM (B, K) int32; q_ref/k_ref: (1, N, D); o_ref: (1, K, K)
    b = pl.program_id(0)
    kk = qs_ref.shape[0]
    for r in range(kk):                                  # K is small & static
        i = idx_ref[b, r]
        qs_ref[pl.ds(r, 1), :] = q_ref[0, pl.ds(i, 1), :]
        ks_ref[pl.ds(r, 1), :] = k_ref[0, pl.ds(i, 1), :]
    # Raw q.k logits on the selected rows/cols.  The reference applies a row
    # softmax over all N columns first, but that is a strictly monotone
    # per-row transform, so the per-row top-k selection below is identical.
    o_ref[0] = lax.dot_general(qs_ref[...], ks_ref[...], (((1,), (1,)), ((), ())),
                               preferred_element_type=jnp.float32)


def rel_scores(q, k, top_k_indices):
    B, N, D = q.shape
    K = top_k_indices.shape[-1]
    grid_spec = pltpu.PrefetchScalarGridSpec(
        num_scalar_prefetch=1,
        grid=(B,),
        in_specs=[
            pl.BlockSpec((1, N, D), lambda b, idx: (b, 0, 0)),
            pl.BlockSpec((1, N, D), lambda b, idx: (b, 0, 0)),
        ],
        out_specs=pl.BlockSpec((1, K, K), lambda b, idx: (b, 0, 0)),
        scratch_shapes=[pltpu.VMEM((K, D), q.dtype),
                        pltpu.VMEM((K, D), k.dtype)],
    )
    return pl.pallas_call(
        _rel_scores_kernel,
        out_shape=jax.ShapeDtypeStruct((B, K, K), jnp.float32),
        grid_spec=grid_spec,
        compiler_params=pltpu.CompilerParams(dimension_semantics=("parallel",)),
    )(top_k_indices.astype(jnp.int32), q, k)


# ----------------------------------------------------------------------------
# Pass C: fused gather(q[subj]) + gather(q[obj]) + add + LayerNorm (eps=1e-5).
# ----------------------------------------------------------------------------
def _gather_add_ln_kernel(subj_ref, obj_ref, q_ref, o_ref, x_ref):
    # subj/obj: SMEM (B, KR) int32; q_ref: (1, N, D); o_ref: (1, KR, D)
    # x_ref: VMEM (KR, D) f32 scratch holding q[subj] + q[obj].
    b = pl.program_id(0)
    kr = x_ref.shape[0]
    for r in range(kr):                                  # static unroll, KR small
        si = subj_ref[b, r]
        oi = obj_ref[b, r]
        x_ref[pl.ds(r, 1), :] = (
            q_ref[0, pl.ds(si, 1), :].astype(jnp.float32)
            + q_ref[0, pl.ds(oi, 1), :].astype(jnp.float32))
    x = x_ref[...]
    mean = jnp.mean(x, axis=-1, keepdims=True)
    xc = x - mean
    var = jnp.mean(xc * xc, axis=-1, keepdims=True)
    o_ref[0] = (xc * lax.rsqrt(var + 1e-5)).astype(o_ref.dtype)


def gather_add_layernorm(q, subject_idx, object_idx):
    B, N, D = q.shape
    KR = subject_idx.shape[-1]
    grid_spec = pltpu.PrefetchScalarGridSpec(
        num_scalar_prefetch=2,
        grid=(B,),
        in_specs=[pl.BlockSpec((1, N, D), lambda b, s, o: (b, 0, 0))],
        out_specs=pl.BlockSpec((1, KR, D), lambda b, s, o: (b, 0, 0)),
        scratch_shapes=[pltpu.VMEM((KR, D), jnp.float32)],
    )
    return pl.pallas_call(
        _gather_add_ln_kernel,
        out_shape=jax.ShapeDtypeStruct((B, KR, D), q.dtype),
        grid_spec=grid_spec,
        compiler_params=pltpu.CompilerParams(dimension_semantics=("parallel",)),
    )(subject_idx.astype(jnp.int32), object_idx.astype(jnp.int32), q)


# ----------------------------------------------------------------------------
# RelationshipAttention.forward
# ----------------------------------------------------------------------------
def relationship_attention(q, k, top_k_instances=10, top_k_relationships=5,
                           use_pallas=None):
    """Returns (subject_object_indices (B, K*R, 3) int32,
                relationship_embeds    (B, K*R, D) q.dtype)."""
    B, N, D = q.shape
    K, R = top_k_instances, top_k_relationships
    KR = K * R
    if use_pallas is None:
        use_pallas = N >= 256      # tiny problems: let XLA fuse instead

    # ---- pass A: diagonal of softmax(q k^T) --------------------------------
    if use_pallas:
        diag = softmax_diag(q, k)                                    # (B, N)
    else:
        s = jnp.einsum("bid,bjd->bij", q, k)
        diag = jnp.diagonal(jax.nn.softmax(s, axis=-1), axis1=-2, axis2=-1)

    _, top_k_indices = lax.top_k(diag, K)                            # (B, K)
    top_k_indices = jnp.sort(top_k_indices, axis=-1).astype(jnp.int32)

    # ---- pass B: K x K relationship scores on the selected instances -------
    if use_pallas:
        rel = rel_scores(q, k, top_k_indices)                        # (B, K, K)
    else:
        q_sel = jnp.take_along_axis(q, top_k_indices[..., None], axis=1)
        k_sel = jnp.take_along_axis(k, top_k_indices[..., None], axis=1)
        rel = jnp.einsum("bid,bjd->bij", q_sel, k_sel)

    _, rel_top = lax.top_k(rel, R)                                   # (B, K, R)
    # torch's scatter(-1)+where walks rows in order and columns ascending
    rel_top = jnp.sort(rel_top, axis=-1)

    row_within = jnp.repeat(jnp.arange(K, dtype=jnp.int32), R)       # (KR,)
    col_within = rel_top.reshape(B, KR)
    subject_instance = top_k_indices[:, row_within]                  # (B, KR)
    object_instance = jnp.take_along_axis(top_k_indices, col_within, axis=1)
    batch_ids = jnp.broadcast_to(jnp.arange(B, dtype=jnp.int32)[:, None], (B, KR))
    subject_object_indices = jnp.stack(
        [batch_ids, subject_instance, object_instance], axis=-1)     # (B, KR, 3)

    # ---- pass C: fused gather + add + LayerNorm -----------------------------
    if use_pallas:
        relationship_embeds = gather_add_layernorm(
            q, subject_instance, object_instance)
    else:
        x = (jnp.take_along_axis(q, subject_instance[..., None], axis=1)
             + jnp.take_along_axis(q, object_instance[..., None], axis=1))
        mean = jnp.mean(x, axis=-1, keepdims=True)
        var = jnp.mean((x - mean) ** 2, axis=-1, keepdims=True)
        relationship_embeds = (x - mean) * lax.rsqrt(var + 1e-5)

    return subject_object_indices, relationship_embeds


# ----------------------------------------------------------------------------
# Pure-JAX reference (numerical check, full softmax path)
# ----------------------------------------------------------------------------
def _reference(q, k, K=10, R=5):
    B, N, D = q.shape
    scores = jax.nn.softmax(jnp.einsum("bid,bjd->bij", q, k), axis=-1)
    diag = jnp.diagonal(scores, axis1=-2, axis2=-1)
    _, tki = lax.top_k(diag, K)
    tki = jnp.sort(tki, axis=-1)
    rows = jnp.take_along_axis(scores, tki[:, :, None], axis=1)
    rel = jnp.take_along_axis(rows, tki[:, None, :], axis=2)
    _, rti = lax.top_k(rel, R)
    rti = jnp.sort(rti, axis=-1)
    row_w = jnp.repeat(jnp.arange(K), R)
    col_w = rti.reshape(B, K * R)
    subj = tki[:, row_w]
    obj = jnp.take_along_axis(tki, col_w, axis=1)
    bids = jnp.broadcast_to(jnp.arange(B)[:, None], (B, K * R))
    x = q[bids, subj] + q[bids, obj]
    mean = jnp.mean(x, axis=-1, keepdims=True)
    var = jnp.mean((x - mean) ** 2, axis=-1, keepdims=True)
    emb = (x - mean) / jnp.sqrt(var + 1e-5)
    soi = jnp.stack([bids, subj, obj], axis=-1)
    return soi, emb


if __name__ == "__main__":
    # Small shapes consistent with the module's (b, i, d) inputs.
    B, N, D = 2, 16, 32
    key = jax.random.PRNGKey(0)
    kq, kk_ = jax.random.split(key)
    q = jax.random.normal(kq, (B, N, D), dtype=jnp.float32)
    k = jax.random.normal(kk_, (B, N, D), dtype=jnp.float32)

    # Force the Pallas path so the kernels are exercised even at demo size.
    soi, rel_embeds = relationship_attention(q, k,
                                             top_k_instances=10,
                                             top_k_relationships=5,
                                             use_pallas=True)
    jax.block_until_ready(rel_embeds)

    # Cross-check against a pure-JAX reference (full softmax path).
    soi_ref, emb_ref = _reference(q, k, K=10, R=5)
    assert soi.shape == (B, 50, 3) and rel_embeds.shape == (B, 50, D)
    np.testing.assert_array_equal(np.asarray(soi), np.asarray(soi_ref))
    np.testing.assert_allclose(np.asarray(rel_embeds), np.asarray(emb_ref),
                               rtol=1e-5, atol=1e-5)

    print("KERNEL_OK")
</pallas_src>

<mosaic_0001>
module attributes {stable_mosaic.version = 11 : i64} {
  func.func @_softmax_diag_kernel(%arg0: i32, %arg1: i32, %arg2: memref<1x16x32xf32, #tpu.memory_space<vmem>>, %arg3: memref<1x16x32xf32, #tpu.memory_space<vmem>>, %arg4: memref<1x16x32xf32, #tpu.memory_space<vmem>>, %arg5: memref<1x16x1xf32, #tpu.memory_space<vmem>>) attributes {dimension_semantics = [#tpu.dimension_semantics<parallel>, #tpu.dimension_semantics<parallel>], iteration_bounds = array<i64: 2, 1>, scalar_prefetch = 0 : i64, scratch_operands = 0 : i64, tpu.core_type = #tpu.core_type<tc>, window_params = [{transform_indices = @transform_0, window_bounds = array<i64: 1, 16, 32>}, {transform_indices = @transform_1, window_bounds = array<i64: 1, 16, 32>}, {transform_indices = @transform_2, window_bounds = array<i64: 1, 16, 32>}, {transform_indices = @transform_3, window_bounds = array<i64: 1, 16, 1>}]} {
    %c0 = arith.constant 0 : index
    %c0_0 = arith.constant 0 : index
    %c0_1 = arith.constant 0 : index
    %0 = vector.load %arg2[%c0, %c0_0, %c0_1] : memref<1x16x32xf32, #tpu.memory_space<vmem>>, vector<1x16x32xf32>
    %1 = vector.shape_cast %0 : vector<1x16x32xf32> to vector<16x32xf32>
    %c0_2 = arith.constant 0 : index
    %c0_3 = arith.constant 0 : index
    %c0_4 = arith.constant 0 : index
    %2 = vector.load %arg3[%c0_2, %c0_3, %c0_4] : memref<1x16x32xf32, #tpu.memory_space<vmem>>, vector<1x16x32xf32>
    %3 = vector.shape_cast %2 : vector<1x16x32xf32> to vector<16x32xf32>
    %cst = arith.constant dense<0.000000e+00> : vector<16x16xf32>
    %4 = tpu.matmul %1, %3, %cst {dimension_numbers = #tpu.dot_dimension_numbers<[1], [1], [0], [0], [0, 0, 1, 0], [], []>} : vector<16x32xf32>, vector<16x32xf32>, vector<16x16xf32> -> vector<16x16xf32>
    %cst_5 = arith.constant dense<0xFF800000> : vector<16xf32>
    %5 = vector.multi_reduction <maximumf>, %4, %cst_5 [1] : vector<16x16xf32> to vector<16xf32>
    %6 = vector.shape_cast %5 : vector<16xf32> to vector<16x1xf32>
    %7 = vector.broadcast %6 : vector<16x1xf32> to vector<16x16xf32>
    %8 = arith.subf %4, %7 : vector<16x16xf32>
    %9 = math.exp %8 : vector<16x16xf32>
    %cst_6 = arith.constant dense<0.000000e+00> : vector<16xf32>
    %10 = vector.multi_reduction <add>, %9, %cst_6 [1] : vector<16x16xf32> to vector<16xf32>
    %11 = vector.shape_cast %10 : vector<16xf32> to vector<16x1xf32>
    %c0_7 = arith.constant 0 : index
    %c0_8 = arith.constant 0 : index
    %c0_9 = arith.constant 0 : index
    %12 = vector.load %arg2[%c0_7, %c0_8, %c0_9] : memref<1x16x32xf32, #tpu.memory_space<vmem>>, vector<1x16x32xf32>
    %13 = vector.shape_cast %12 : vector<1x16x32xf32> to vector<16x32xf32>
    %c0_10 = arith.constant 0 : index
    %c0_11 = arith.constant 0 : index
    %c0_12 = arith.constant 0 : index
    %14 = vector.load %arg4[%c0_10, %c0_11, %c0_12] : memref<1x16x32xf32, #tpu.memory_space<vmem>>, vector<1x16x32xf32>
    %15 = vector.shape_cast %14 : vector<1x16x32xf32> to vector<16x32xf32>
    %16 = arith.mulf %13, %15 : vector<16x32xf32>
    %cst_13 = arith.constant dense<0.000000e+00> : vector<16xf32>
    %17 = vector.multi_reduction <add>, %16, %cst_13 [1] : vector<16x32xf32> to vector<16xf32>
    %18 = vector.shape_cast %17 : vector<16xf32> to vector<16x1xf32>
    %19 = arith.subf %18, %6 : vector<16x1xf32>
    %20 = math.exp %19 : vector<16x1xf32>
    %21 = arith.divf %20, %11 : vector<16x1xf32>
    %c0_14 = arith.constant 0 : index
    %c0_15 = arith.constant 0 : index
    %c0_16 = arith.constant 0 : index
    %22 = vector.load %arg5[%c0_14, %c0_15, %c0_16] : memref<1x16x1xf32, #tpu.memory_space<vmem>>, vector<1x16x1xf32>
    %23 = vector.shape_cast %22 : vector<1x16x1xf32> to vector<16x1xf32>
    %24 = vector.shape_cast %21 : vector<16x1xf32> to vector<1x16x1xf32>
    tpu.vector_store %arg5[%c0_14, %c0_15, %c0_16], %24 {strides = array<i32>} : memref<1x16x1xf32, #tpu.memory_space<vmem>>, vector<1x16x1xf32>,
    return
  }
  func.func @transform_0(%arg0: i32, %arg1: i32) -> (i32, i32, i32) {
    %c0_i32 = arith.constant 0 : i32
    %c0_i32_0 = arith.constant 0 : i32
    return %arg0, %arg1, %c0_i32 : i32, i32, i32
  }
  func.func @transform_1(%arg0: i32, %arg1: i32) -> (i32, i32, i32) {
    %c0_i32 = arith.constant 0 : i32
    %c0_i32_0 = arith.constant 0 : i32
    %c0_i32_1 = arith.constant 0 : i32
    return %arg0, %c0_i32, %c0_i32_0 : i32, i32, i32
  }
  func.func @transform_2(%arg0: i32, %arg1: i32) -> (i32, i32, i32) {
    %c0_i32 = arith.constant 0 : i32
    %c0_i32_0 = arith.constant 0 : i32
    return %arg0, %arg1, %c0_i32 : i32, i32, i32
  }
  func.func @transform_3(%arg0: i32, %arg1: i32) -> (i32, i32, i32) {
    %c0_i32 = arith.constant 0 : i32
    %c0_i32_0 = arith.constant 0 : i32
    return %arg0, %arg1, %c0_i32 : i32, i32, i32
  }
}

</mosaic_0001>

<llo_original>
// kernel: tpu_custom_call.1
$region0: #{tpu_custom_call.1}
  #allocation0 [shape = 'u32[]', space=smem, size = 0x4, offset = 0x4, fixed_abs, tag = 'smem constant byte address 0x4 - core index']
  #allocation1 [shape = 'u32[144,128]{1,0:T(1,128)}', space=vmem, size = 0x12000, scoped, tag = 'internal scratch']
  %s0 = inlined_call_operand.hbm [shape: f32[2,16,32], index: 0, kind: input, shape index: {}]
  %s1 = inlined_call_operand.hbm [shape: f32[2,16,32], index: 1, kind: input, shape index: {}]
  %s2 = inlined_call_operand.hbm [shape: f32[2,16,32], index: 2, kind: input, shape index: {}]
  %s3 = inlined_call_operand.vmem [shape: f32[2,16,1], index: 3, kind: output, shape index: {}]
  %s4 = sld [smem:[#allocation0]]
  $region57: #{tpu_custom_call.1} parent=0
    _
  %s6 = ssub.s32 1, %s4
  %s7 = scalar_select 0, %s6, %s4
  $region1: #{tpu_custom_call.1} parent=0
    #allocation2 [shape = 'u8[16384]{0}', space=vmem, size = 0x4000, scoped, tag = 'input window, operand 0']
    #allocation3 [shape = 's32[2]{0}', space=sflag, size = 0x8, scoped, tag = 'scoped memory for tpu_custom_call.1']
    #allocation4 [shape = 'u8[16384]{0}', space=vmem, size = 0x4000, scoped, tag = 'input window, operand 1']
    #allocation5 [shape = 's32[2]{0}', space=sflag, size = 0x8, scoped, tag = 'scoped memory for tpu_custom_call.1']
    #allocation6 [shape = 'u8[16384]{0}', space=vmem, size = 0x4000, scoped, tag = 'input window, operand 2']
    %8 = vsyncpa [#allocation3], 0
    %s9 = scalar_lea.sflag [#allocation3], 1
    %10 = vsyncpa %s9, 0
    %11 = vsyncpa [#allocation5], 0
    %s12 = scalar_lea.sflag [#allocation5], 1
    %13 = vsyncpa %s12, 0
    loop: start=0, step=1, limit=4
    $region2: #{tpu_custom_call.1} parent=1 // loop_pre_header
      _
    $region3: #{tpu_custom_call.1} parent=1 // loop_header
      %s15 = sphi 0, %s19
      %p16 = scmp.ge.s32.totalorder %s15, 4
      %s22 = sphi 0, %s34
      %s23 = sphi 0, %s30
      %s24 = sphi 0, %s22
      %s25 = sphi 0, %s23
      %s26 = sphi 0, %s24
      %s27 = sphi 0, %s25
      %s39 = sphi 0, %s41
      %s42 = sphi 0, %s39
      %s43 = sphi 0, %s42
      %s59 = sphi 0, %s43
      %s65 = sphi 0, %s67
      %s68 = sphi 0, %s65
      %s69 = sphi 0, %s68
      %s85 = sphi 0, %s69
      %s93 = sphi 0, %s95
      %s96 = sphi 0, %s93
      %s97 = sphi 0, %s96
      %s113 = sphi 0, %s97
      %s121 = sphi 0, %s123
      %s124 = sphi 0, %s121
      %s125 = sphi 0, %s124
      %s141 = sphi 0, %s125
    $region4: #{tpu_custom_call.1} parent=1 // loop_header_branch
      %18 = sbr.rel (%p16) target = $region8
    $region5: #{tpu_custom_call.1} parent=1 // loop_body
      %s20 = ssub.s32 %s15, 1
      %s21 = ssub.s32 %s15, 2
      %s28 = sadd.s32 1, %s23
      %p29 = scmp.ge.s32.totalorder %s28, 1
      %s30 = scalar_select %p29, 0, %s28
      %s31 = sadd.s32 1, %s22
      %s32 = scalar_select %p29, %s31, %s22
      %p33 = scmp.ge.s32.totalorder %s32, 2
      %s34 = scalar_select %p33, 0, %s32
      %s35 = ssub.s32 %s22, %s34
      %s36 = ssub.s32 %s23, %s30
      %s37 = sor.u32 %s35, %s36
      %p38 = scmp.eq.s32.totalorder %s37, 0
      %s40 = sadd.s32 %s39, 1
      %s41 = scalar_select %p38, %s39, %s40
      %p44 = pneg %p38
      %p45 = scmp.eq.s32.totalorder %s15, 1
      %p46 = por %p44, %p45
      %p47 = scmp.ne.s32.totalorder %s39, %s42
      %p48 = scmp.eq.s32.totalorder %s15, 0
      %p49 = por %p47, %p48
      %p50 = scmp.ne.s32.totalorder %s39, %s42
      %p51 = scmp.eq.s32.totalorder %s20, 1
      %p52 = por %p50, %p51
      %p53 = scmp.ne.s32.totalorder %s42, %s43
      %p54 = scmp.eq.s32.totalorder %s20, 0
      %p55 = por %p53, %p54
      %p56 = scmp.ne.s32.totalorder %s42, %s43
      %p57 = scmp.eq.s32.totalorder %s21, 1
      %p58 = por %p56, %p57
      %p60 = scmp.ne.s32.totalorder %s43, %s59
      %p61 = scmp.eq.s32.totalorder %s21, 0
      %p62 = por %p60, %p61
      %s63 = ssub.s32 %s22, %s34
      %p64 = scmp.eq.s32.totalorder %s63, 0
      %s66 = sadd.s32 %s65, 1
      %s67 = scalar_select %p64, %s65, %s66
      %p70 = pneg %p64
      %p71 = scmp.eq.s32.totalorder %s15, 1
      %p72 = por %p70, %p71
      %p73 = scmp.ne.s32.totalorder %s65, %s68
      %p74 = scmp.eq.s32.totalorder %s15, 0
      %p75 = por %p73, %p74
      %p76 = scmp.ne.s32.totalorder %s65, %s68
      %p77 = scmp.eq.s32.totalorder %s20, 1
      %p78 = por %p76, %p77
      %p79 = scmp.ne.s32.totalorder %s68, %s69
      %p80 = scmp.eq.s32.totalorder %s20, 0
      %p81 = por %p79, %p80
      %p82 = scmp.ne.s32.totalorder %s68, %s69
      %p83 = scmp.eq.s32.totalorder %s21, 1
      %p84 = por %p82, %p83
      %p86 = scmp.ne.s32.totalorder %s69, %s85
      %p87 = scmp.eq.s32.totalorder %s21, 0
      %p88 = por %p86, %p87
      %s89 = ssub.s32 %s22, %s34
      %s90 = ssub.s32 %s23, %s30
      %s91 = sor.u32 %s89, %s90
      %p92 = scmp.eq.s32.totalorder %s91, 0
      %s94 = sadd.s32 %s93, 1
      %s95 = scalar_select %p92, %s93, %s94
      %p98 = pneg %p92
      %p99 = scmp.eq.s32.totalorder %s15, 1
      %p100 = por %p98, %p99
      %p101 = scmp.ne.s32.totalorder %s93, %s96
      %p102 = scmp.eq.s32.totalorder %s15, 0
      %p103 = por %p101, %p102
      %p104 = scmp.ne.s32.totalorder %s93, %s96
      %p105 = scmp.eq.s32.totalorder %s20, 1
      %p106 = por %p104, %p105
      %p107 = scmp.ne.s32.totalorder %s96, %s97
      %p108 = scmp.eq.s32.totalorder %s20, 0
      %p109 = por %p107, %p108
      %p110 = scmp.ne.s32.totalorder %s96, %s97
      %p111 = scmp.eq.s32.totalorder %s21, 1
      %p112 = por %p110, %p111
      %p114 = scmp.ne.s32.totalorder %s97, %s113
      %p115 = scmp.eq.s32.totalorder %s21, 0
      %p116 = por %p114, %p115
      %s117 = ssub.s32 %s22, %s34
      %s118 = ssub.s32 %s23, %s30
      %s119 = sor.u32 %s117, %s118
      %p120 = scmp.eq.s32.totalorder %s119, 0
      %s122 = sadd.s32 %s121, 1
      %s123 = scalar_select %p120, %s121, %s122
      %p126 = pneg %p120
      %p127 = scmp.eq.s32.totalorder %s15, 1
      %p128 = por %p126, %p127
      %p129 = scmp.ne.s32.totalorder %s121, %s124
      %p130 = scmp.eq.s32.totalorder %s15, 0
      %p131 = por %p129, %p130
      %p132 = scmp.ne.s32.totalorder %s121, %s124
      %p133 = scmp.eq.s32.totalorder %s20, 1
      %p134 = por %p132, %p133
      %p135 = scmp.ne.s32.totalorder %s124, %s125
      %p136 = scmp.eq.s32.totalorder %s20, 0
      %p137 = por %p135, %p136
      %p138 = scmp.ne.s32.totalorder %s124, %s125
      %p139 = scmp.eq.s32.totalorder %s21, 1
      %p140 = por %p138, %p139
      %p142 = scmp.ne.s32.totalorder %s125, %s141
      %p143 = scmp.eq.s32.totalorder %s21, 0
      %p144 = por %p142, %p143
      %p145 = scmp.le.s32.totalorder 1, %s15
      %p146 = scmp.lt.s32.totalorder %s15, 3
      %p147 = pnand %p145, %p146
      %p148 = pneg %p147
      // Predicated region
      $region9: #{tpu_custom_call.1} parent=5 // pred_check
        _
      $region10: #{tpu_custom_call.1} parent=5 // pred_check_branch
        %150 = sbr.rel (%p147) target = $region12
      $region11: #{tpu_custom_call.1} parent=5 // pred_region
        %s151 = ssub.s32 %s15, 1
      $region12: #{tpu_custom_call.1} parent=5 // pred_fallthru
        _
      %p152 = scmp.lt.s32.totalorder %s15, 2
      // Predicated region
      $region13: #{tpu_custom_call.1} parent=5 // pred_check
        %p153 = pneg %p152
      $region14: #{tpu_custom_call.1} parent=5 // pred_check_branch
        %155 = sbr.rel (%p153) target = $region16
      $region15: #{tpu_custom_call.1} parent=5 // pred_region
        // Predicated region
        $region17: #{tpu_custom_call.1} parent=15 // pred_check
          %p156 = pneg %p49
        $region18: #{tpu_custom_call.1} parent=15 // pred_check_branch
          %158 = sbr.rel (%p156) target = $region20
        $region19: #{tpu_custom_call.1} parent=15 // pred_region
          %s159 = sand.u32 %s39, 1
          %s160 = scalar_lea.sflag [#allocation3], %s159
          %s161 = sand.u32 %s39, 1
          %s162 = smul.addr %s161, 16
          %s163 = scalar_lea.vmem [#allocation2], %s162
          %s164 = smul.u32 2, %s23
          %s166 = ssub.s32 256, 256
          %167 = vsyncadd %s160, %s166
          %s168 = smul.addr %s22, 2
          %s169 = sadd.s32 %s164, %s168
          %s170 = smul.addr %s169, 128
          %s171 = scalar_lea.hbm %s0, %s170
          %s172 = sshll.u32 %s163, 4
          %s173 = int_to_ptr.vmem [resolvable:$true] %s172
          %178 = dma.hbm_to_vmem [thread:$0]  %s171, 256, %s173, %s160, 128, 128, 8
        $region20: #{tpu_custom_call.1} parent=15 // pred_fallthru
          _
        // Predicated region
        $region21: #{tpu_custom_call.1} parent=15 // pred_check
          %p179 = pneg %p75
        $region22: #{tpu_custom_call.1} parent=15 // pred_check_branch
          %181 = sbr.rel (%p179) target = $region24
        $region23: #{tpu_custom_call.1} parent=15 // pred_region
          %s182 = sand.u32 %s15, 1
          %s183 = scalar_lea.sflag [#allocation5], %s182
          %s184 = sand.u32 %s65, 1
          %s185 = smul.addr %s184, 16
          %s186 = scalar_lea.vmem [#allocation4], %s185
          %s188 = ssub.s32 256, 256
          %189 = vsyncadd %s183, %s188
          %s190 = smul.addr %s22, 2
          %s191 = smul.addr %s190, 128
          %s192 = scalar_lea.hbm %s1, %s191
          %s193 = sshll.u32 %s186, 4
          %s194 = int_to_ptr.vmem [resolvable:$true] %s193
          %199 = dma.hbm_to_vmem [thread:$0]  %s192, 256, %s194, %s183, 128, 128, 8
        $region24: #{tpu_custom_call.1} parent=15 // pred_fallthru
          _
        // Predicated region
        $region25: #{tpu_custom_call.1} parent=15 // pred_check
          %p200 = pneg %p103
        $region26: #{tpu_custom_call.1} parent=15 // pred_check_branch
          %202 = sbr.rel (%p200) target = $region28
        $region27: #{tpu_custom_call.1} parent=15 // pred_region
          %s203 = sand.u32 %s15, 1
          %s204 = scalar_lea.sflag [#allocation5], %s203
          %s205 = sand.u32 %s93, 1
          %s206 = smul.addr %s205, 16
          %s207 = scalar_lea.vmem [#allocation6], %s206
          %s208 = smul.u32 2, %s23
          %s210 = ssub.s32 256, 256
          %211 = vsyncadd %s204, %s210
          %s212 = smul.addr %s22, 2
          %s213 = sadd.s32 %s208, %s212
          %s214 = smul.addr %s213, 128
          %s215 = scalar_lea.hbm %s2, %s214
          %s216 = sshll.u32 %s207, 4
          %s217 = int_to_ptr.vmem [resolvable:$true] %s216
          %222 = dma.hbm_to_vmem [thread:$0]  %s215, 256, %s217, %s204, 128, 128, 8
        $region28: #{tpu_custom_call.1} parent=15 // pred_fallthru
          _
      $region16: #{tpu_custom_call.1} parent=5 // pred_fallthru
        _
      %p223 = scmp.le.s32.totalorder 1, %s15
      %p224 = scmp.lt.s32.totalorder %s15, 3
      %p225 = pnand %p223, %p224
      %p226 = pneg %p225
      // Predicated region
      $region29: #{tpu_custom_call.1} parent=5 // pred_check
        _
      $region30: #{tpu_custom_call.1} parent=5 // pred_check_branch
        %228 = sbr.rel (%p225) target = $region32
      $region31: #{tpu_custom_call.1} parent=5 // pred_region
        %s229 = ssub.s32 %s15, 1
        %s230 = sand.u32 %s42, 1
        %s231 = scalar_lea.sflag [#allocation3], %s230
        %s232 = sand.u32 %s42, 1
        %s233 = smul.addr %s232, 16
        %s234 = scalar_lea.vmem [#allocation2], %s233
        // Predicated region
        $region33: #{tpu_custom_call.1} parent=31 // pred_check
          %p235 = pneg %p55
        $region34: #{tpu_custom_call.1} parent=31 // pred_check_branch
          %237 = sbr.rel (%p235) target = $region36
        $region35: #{tpu_custom_call.1} parent=31 // pred_region
          %238 = dma.done %s231, 256
        $region36: #{tpu_custom_call.1} parent=31 // pred_fallthru
          _
        %s239 = sand.u32 %s20, 1
        %s240 = scalar_lea.sflag [#allocation5], %s239
        %s241 = sand.u32 %s68, 1
        %s242 = smul.addr %s241, 16
        %s243 = scalar_lea.vmem [#allocation4], %s242
        // Predicated region
        $region37: #{tpu_custom_call.1} parent=31 // pred_check
          %p244 = pneg %p81
        $region38: #{tpu_custom_call.1} parent=31 // pred_check_branch
          %246 = sbr.rel (%p244) target = $region40
        $region39: #{tpu_custom_call.1} parent=31 // pred_region
          %247 = dma.done %s240, 256
        $region40: #{tpu_custom_call.1} parent=31 // pred_fallthru
          _
        %s248 = sand.u32 %s20, 1
        %s249 = scalar_lea.sflag [#allocation5], %s248
        %s250 = sand.u32 %s96, 1
        %s251 = smul.addr %s250, 16
        %s252 = scalar_lea.vmem [#allocation6], %s251
        // Predicated region
        $region41: #{tpu_custom_call.1} parent=31 // pred_check
          %p253 = pneg %p109
        $region42: #{tpu_custom_call.1} parent=31 // pred_check_branch
          %255 = sbr.rel (%p253) target = $region44
        $region43: #{tpu_custom_call.1} parent=31 // pred_region
          %256 = dma.done %s249, 256
        $region44: #{tpu_custom_call.1} parent=31 // pred_fallthru
          _
        %s257 = sand.u32 %s42, 1
        %s258 = scalar_lea.sflag [#allocation3], %s257
        %s259 = sand.u32 %s42, 1
        %s260 = smul.addr %s259, 16
        %s261 = scalar_lea.vmem [#allocation2], %s260
        %p262 = pneg %p55
        %p263 = pneg %p52
        %s264 = sand.u32 %s20, 1
        %s265 = scalar_lea.sflag [#allocation5], %s264
        %s266 = sand.u32 %s68, 1
        %s267 = smul.addr %s266, 16
        %s268 = scalar_lea.vmem [#allocation4], %s267
        %p269 = pneg %p81
        %p270 = pneg %p78
        %s271 = sand.u32 %s20, 1
        %s272 = scalar_lea.sflag [#allocation5], %s271
        %s273 = sand.u32 %s96, 1
        %s274 = smul.addr %s273, 16
        %s275 = scalar_lea.vmem [#allocation6], %s274
        %p276 = pneg %p109
        %p277 = pneg %p106
        %p278 = pneg %p137
        %p279 = pneg %p134
        %s280 = smul.u32 2, %s25
        %p281 = scmp.lt.s32.totalorder %s24, 1
        %s282 = scalar_select %p281, %s24, 1
        %p283 = scmp.lt.s32.totalorder %s280, 1
        %s284 = scalar_select %p283, %s280, 1
        %s285 = smul.addr %s282, 2
        %s286 = sadd.s32 %s284, %s285
        %s287 = smul.addr %s286, 8
        %s288 = scalar_lea.vmem %s3, %s287
        %s289 = smul.u32 2, %s25
        %s290 = smul.u32 2, %s25
        %s291 = smul.u32 2, %s25
        %p292 = scmp.lt.s32.totalorder %s24, 1
        %s293 = scalar_select %p292, %s24, 1
        %p294 = scmp.lt.s32.totalorder %s291, 1
        %s295 = scalar_select %p294, %s291, 1
        %s296 = smul.addr %s293, 2
        %s297 = sadd.s32 %s295, %s296
        %s298 = smul.addr %s297, 8
        %s299 = scalar_lea.vmem %s3, %s298
        %s300 = smul.u32 2, %s25
        %v301 = vld [vmem:[%s234] sm:$0xff]
        %v302 = vld [vmem:[%s234 + $0x8] sm:$0xff]
        %v303 = vld [vmem:[%s243] sm:$0xff]
        %v304 = vld [vmem:[%s243 + $0x8] sm:$0xff]
        %vm305 = vcmask 261120
        %v307 = vsel %vm305, %v301, 0
        %v310 = vsel %vm305, %v302, 0
        %v313 = vsel %vm305, %v303, 0
        %v316 = vsel %vm305, %v304, 0
        %318 = vmatprep.subr.mxu0 0.0
        %319 = vmatpush1.xpose.msra.mxu0 %v313
        %320 = vmatprep.subr.mxu0 0.0
        %321 = vmatpush1.xpose.msra.mxu0 %v316
        %322 = vmatprep.subr.mxu0 0.0
        %323 = vmatpush1.xpose.msra.mxu0 0.0
        %324 = vmatprep.subr.mxu0 0.0
        %325 = vmatpush1.xpose.msra.mxu0 0.0
        %326 = vmatprep.subr.mxu0 0.0
        %327 = vmatpush1.xpose.msra.mxu0 0.0
        %328 = vmatprep.subr.mxu0 0.0
        %329 = vmatpush1.xpose.msra.mxu0 0.0
        %330 = vmatprep.subr.mxu0 0.0
        %331 = vmatpush1.xpose.msra.mxu0 0.0
        %332 = vmatprep.subr.mxu0 0.0
        %333 = vmatpush1.xpose.msra.mxu0 0.0
        %334 = vmatprep.subr.mxu0 0.0
        %335 = vmatpush1.xpose.msra.mxu0 0.0
        %336 = vmatprep.subr.mxu0 0.0
        %337 = vmatpush1.xpose.msra.mxu0 0.0
        %338 = vmatprep.subr.mxu0 0.0
        %339 = vmatpush1.xpose.msra.mxu0 0.0
        %340 = vmatprep.subr.mxu0 0.0
        %341 = vmatpush1.xpose.msra.mxu0 0.0
        %342 = vmatprep.subr.mxu0 0.0
        %343 = vmatpush1.xpose.msra.mxu0 0.0
        %344 = vmatprep.subr.mxu0 0.0
        %345 = vmatpush1.xpose.msra.mxu0 0.0
        %346 = vmatprep.subr.mxu0 0.0
        %347 = vmatpush1.xpose.msra.mxu0 0.0
        %348 = vmatprep.subr.mxu0 0.0
        %349 = vmatpush1.xpose.msra.mxu0 0.0
        %350 = vmatprep.subr.mxu0 0.0
        %351 = vmatpush1.xpose.msra.mxu0 0.0
        %352 = vmatprep.subr.mxu0 0.0
        %353 = vmatpush1.xpose.msra.mxu0 0.0
        %354 = vmatprep.subr.mxu0 0.0
        %355 = vmatpush1.xpose.msra.mxu0 0.0
        %356 = vmatprep.subr.mxu0 0.0
        %357 = vmatpush1.xpose.msra.mxu0 0.0
        %358 = vmatprep.subr.mxu0 0.0
        %359 = vmatpush1.xpose.msra.mxu0 0.0
        %360 = vmatprep.subr.mxu0 0.0
        %361 = vmatpush1.xpose.msra.mxu0 0.0
        %362 = vmatprep.subr.mxu0 0.0
        %363 = vmatpush1.xpose.msra.mxu0 0.0
        %364 = vmatprep.subr.mxu0 0.0
        %365 = vmatpush1.xpose.msra.mxu0 0.0
        %366 = vmatprep.subr.mxu0 0.0
        %367 = vmatpush1.xpose.msra.mxu0 0.0
        %368 = vmatprep.subr.mxu0 0.0
        %369 = vmatpush1.xpose.msra.mxu0 0.0
        %370 = vmatprep.subr.mxu0 0.0
        %371 = vmatpush1.xpose.msra.mxu0 0.0
        %372 = vmatprep.subr.mxu0 0.0
        %373 = vmatpush1.xpose.msra.mxu0 0.0
        %374 = vmatprep.subr.mxu0 0.0
        %375 = vmatpush1.xpose.msra.mxu0 0.0
        %376 = vmatprep.subr.mxu0 0.0
        %377 = vmatpush1.xpose.msra.mxu0 0.0
        %378 = vmatprep.subr.mxu0 0.0
        %379 = vmatpush1.xpose.msra.mxu0 0.0
        %380 = vmatprep.subr.mxu0 0.0
        %381 = vmatpush1.xpose.msra.mxu0 0.0
        %382 = vmatprep.mubr.f32.mxu0 0.0
        %383 = vmatmul.mubr.f32.gmra.mrb[0].mxu0 %v307
        %v384 = vpop.f32.mrb[0].mxu0
        %v385 = vadd.f32 0.0, %v384
        %v386 = vpop.f32.mrb[0].mxu0
        %387 = vmatprep.mubr.f32.mxu0 0.0
        %388 = vmatmul.mubr.f32.gmra.mrb[0].mxu0 %v310
        %v389 = vpop.f32.mrb[0].mxu0
        %v390 = vadd.f32 0.0, %v389
        %v391 = vpop.f32.mrb[0].mxu0
        %392 = vdwg.mxu0
        %vm393 = vcmask 130048
        %v394 = vsel %vm393, %v385, -inf
        %395 = vmax.xlane.f32.xlu0 %v394
        %v396 = vpop.xlane.xlu0 %395
        %v397 = vsel %vm393, %v390, -inf
        %398 = vmax.xlane.f32.xlu0 %v397
        %v399 = vpop.xlane.xlu0 %398
        %v400 = vsub.f32 %v385, %v396
        %v401 = vsub.f32 %v390, %v399
        %v402 = vmul.f32 %v400, 1.442695
        %v403 = vpow.pop %v402
        %v404 = vmul.f32 %v401, 1.442695
        %v405 = vpow.pop %v404
        %v406 = vsel %vm393, %v403, 0.0
        %407 = vadd.xlane.f32.xlu0 %v406
        %v408 = vpop.xlane.xlu0 %407
        %v409 = vsel %vm393, %v405, 0.0
        %410 = vadd.xlane.f32.xlu0 %v409
        %v411 = vpop.xlane.xlu0 %410
        %v412 = vld [vmem:[%s252] sm:$0xff]
        %v413 = vld [vmem:[%s252 + $0x8] sm:$0xff]
        %v414 = vmul.f32 %v301, %v412
        %v415 = vmul.f32 %v302, %v413
        %v416 = vsel %vm305, %v414, 0.0
        %417 = vadd.xlane.f32.xlu0 %v416
        %v418 = vpop.xlane.xlu0 %417
        %v419 = vsel %vm305, %v415, 0.0
        %420 = vadd.xlane.f32.xlu0 %v419
        %v421 = vpop.xlane.xlu0 %420
        %v422 = vsub.f32 %v418, %v396
        %v423 = vsub.f32 %v421, %v399
        %v424 = vmul.f32 %v422, 1.442695
        %v425 = vpow.pop %v424
        %v426 = vmul.f32 %v423, 1.442695
        %v427 = vpow.pop %v426
        %v428 = vrcp.pop %v408
        %v429 = vmul.f32 %v425, %v428
        %v430 = vrcp.pop %v411
        %v431 = vmul.f32 %v427, %v430
        %vm432 = vcmask 7168
        %433 = vst.msk [vmem:[%s299] sm:$0xff] %vm432, %v429
        %434 = vst.msk [vmem:[%s299 + $0x8] sm:$0xff] %vm432, %v431
        %s435 = smul.u32 2, %s25
        %p436 = scmp.lt.s32.totalorder %s24, 1
        %s437 = scalar_select %p436, %s24, 1
        %p438 = scmp.lt.s32.totalorder %s435, 1
        %s439 = scalar_select %p438, %s435, 1
        %s440 = smul.addr %s437, 2
        %s441 = sadd.s32 %s439, %s440
        %s442 = smul.addr %s441, 8
        %s443 = scalar_lea.vmem %s3, %s442
        // Predicated region
        $region45: #{tpu_custom_call.1} parent=31 // pred_check
          %p444 = pneg %p134
        $region46: #{tpu_custom_call.1} parent=31 // pred_check_branch
          %446 = sbr.rel (%p444) target = $region48
        $region47: #{tpu_custom_call.1} parent=31 // pred_region
          %s447 = smul.u32 2, %s25
        $region48: #{tpu_custom_call.1} parent=31 // pred_fallthru
          _
      $region32: #{tpu_custom_call.1} parent=5 // pred_fallthru
        _
      %p448 = scmp.le.s32.totalorder 2, %s15
      // Predicated region
      $region49: #{tpu_custom_call.1} parent=5 // pred_check
        %p449 = pneg %p448
      $region50: #{tpu_custom_call.1} parent=5 // pred_check_branch
        %451 = sbr.rel (%p449) target = $region52
      $region51: #{tpu_custom_call.1} parent=5 // pred_region
        %s452 = ssub.s32 %s15, 2
        // Predicated region
        $region53: #{tpu_custom_call.1} parent=51 // pred_check
          %p453 = pneg %p140
        $region54: #{tpu_custom_call.1} parent=51 // pred_check_branch
          %455 = sbr.rel (%p453) target = $region56
        $region55: #{tpu_custom_call.1} parent=51 // pred_region
          %s456 = smul.u32 2, %s27
          %p457 = scmp.lt.s32.totalorder %s26, 1
          %s458 = scalar_select %p457, %s26, 1
          %p459 = scmp.lt.s32.totalorder %s456, 1
          %s460 = scalar_select %p459, %s456, 1
          %s461 = smul.addr %s458, 2
          %s462 = sadd.s32 %s460, %s461
          %s463 = smul.addr %s462, 8
          %s464 = scalar_lea.vmem %s3, %s463
        $region56: #{tpu_custom_call.1} parent=51 // pred_fallthru
          _
      $region52: #{tpu_custom_call.1} parent=5 // pred_fallthru
        _
    $region6: #{tpu_custom_call.1} parent=1 // loop_footer
      %s19 = sadd.s32 1, %s15
    $region7: #{tpu_custom_call.1} parent=1 // loop_footer_branch
      %14 = sbr.rel target = $region3
    $region8: #{tpu_custom_call.1} parent=1 // loop_exit
      _
    %465 = vsyncpa [#allocation3], 1
    %s466 = scalar_lea.sflag [#allocation3], 1
    %467 = vsyncpa %s466, 1
    %468 = vsyncpa [#allocation5], 1
    %s469 = scalar_lea.sflag [#allocation5], 1
    %470 = vsyncpa %s469, 1

</llo_original>
